<compile_context>
chip_gen: v7x
topology: tpu7x:2x2x1
jax: 0.10.0
libtpu: 0.0.40
codegen_flags: <defaults>
</compile_context>

<pallas_src>
import jax
import jax.numpy as jnp
from jax import lax
from jax.experimental import pallas as pl
from jax.experimental.pallas import tpu as pltpu

# Same gamma ladder as MMDLoss.gaussian_kernel
GAMMAS = (0.001, 0.01, 0.1, 1.0, 10.0, 100.0, 1000.0)


def _pow10(v):
    """v ** 10 with 4 VPU multiplies: ((v^2)^2 * v)^2."""
    v2 = v * v
    v4 = v2 * v2
    v5 = v4 * v
    return v5 * v5


def _mmd_pair_kernel(bi_ref, bj_ref, xr_ref, xc_ref, sqr_ref, sqc_ref, out_ref):
    """One (row-domain, col-domain) block pair: S = sum of the gaussian-kernel tile."""
    del bi_ref, bj_ref  # only consumed by the index_maps

    # Gram tile via an NT contraction (no transpose pass), f32 MXU accumulation.
    gram = lax.dot_general(
        xr_ref[...], xc_ref[...], (((1,), (1,)), ((), ())),
        preferred_element_type=jnp.float32,
    )  # (bs, bs)

    sq_r = sqr_ref[...]        # (bs, 1)  ||x_row||^2, sublane-major
    sq_c = sqc_ref[0:1, :]     # (1, bs)  ||x_col||^2, lane-major (static slice)

    # my_cdist: ||a||^2 + ||b||^2 - 2<a,b>, clamped at 1e-30.  The clamp is one
    # cheap VPU op kept on every tile for faithfulness; no diagonal pin is needed
    # any more because the large-gamma terms are direct exps (exp(-1000*1e-30)==1).
    d2 = jnp.maximum(sq_r + sq_c - 2.0 * gram, 1e-30)

    # gaussian_kernel, rebalanced across EUP/VPU slots:
    #   gammas 0.001, 1, 10, 100, 1000 -> direct EUP exp (5 pushes / element)
    #   gammas 0.01, 0.1               -> (exp(-0.001*d2))**10, **100 (8 VPU muls)
    base = jnp.exp(d2 * jnp.float32(-GAMMAS[0]))   # gamma = 0.001
    g_01 = _pow10(base)                            # gamma = 0.01
    g_1 = _pow10(g_01)                             # gamma = 0.1
    kmat = base + g_01 + g_1
    for g in GAMMAS[3:]:                           # 1, 10, 100, 1000
        kmat = kmat + jnp.exp(d2 * jnp.float32(-g))

    # Lane (XLU) reduction first, then sublanes; broadcast the scalar into a
    # lane-dense (8, 128) tile so the store is a plain unmasked vst.
    row_sums = jnp.sum(kmat, axis=1, keepdims=True)        # (bs, 1)
    tile_sum = jnp.sum(row_sums, axis=0, keepdims=True)    # (1, 1)
    out_ref[...] = jnp.broadcast_to(tile_sum, out_ref.shape)


def mmd_loss_pallas(x, n_domains_batch=4, gamma=1.0):
    """Pallas equivalent of MMDLoss(gamma, n_domains_batch, 'gaussian').forward(x)."""
    n, d = x.shape
    nmb = int(n_domains_batch)
    assert n % nmb == 0, "batch must split evenly into domains"
    bs = n // nmb
    # TODO(synk): pad domain blocks when bs is not a sublane multiple; only
    # bs % 8 == 0 (or a single domain) is supported by the (bs, D) BlockSpecs.
    assert bs % 8 == 0 or nmb == 1, "per-domain batch must be a multiple of 8"
    # TODO(synk): only kernel_type='gaussian' (the module default) is implemented;
    # the 'mean_cov' (CORAL) branch of mmd() is not exercised by this config.
    # TODO(synk): for production-sized bs / D, sub-tile rows/cols/D inside a block
    # pair so the per-step footprint stays within a per-generation VMEM budget
    # (v7x: 64 MiB physical / 32 MiB scoped default); at DomainBed sizes a whole
    # (bs, D) pair fits trivially.  For many tiny MMD instances, batch them along
    # lanes instead of micro-optimizing this launch (toy shapes are overhead-bound).

    # Upper triangle (incl. diagonal) of domain-block pairs + combination weights:
    # S_ii enters (nmb-1) pairs with +1, S_ij (i<j) enters once with -2.
    pairs = [(i, j) for i in range(nmb) for j in range(i, nmb)]
    num_pairs = len(pairs)
    bi = jnp.asarray([p[0] for p in pairs], dtype=jnp.int32)
    bj = jnp.asarray([p[1] for p in pairs], dtype=jnp.int32)
    weights = jnp.asarray(
        [float(nmb - 1) if i == j else -2.0 for (i, j) in pairs], dtype=jnp.float32)

    # Prologue: squared norms once (my_cdist's x1_norm / x2_norm), in both layouts.
    # Column norms are replicated to 8 sublanes so the (8, bs) BlockSpec is a
    # legal, fully static tile (no dynamic lane slicing, no in-kernel transpose).
    xf = x.astype(jnp.float32)
    sq = jnp.sum(xf * xf, axis=-1)                         # (N,)
    sq_row = sq.reshape(n, 1)                              # (N, 1) sublane-major
    sq_col = jnp.broadcast_to(
        sq.reshape(nmb, 1, bs), (nmb, 8, bs)).reshape(nmb * 8, bs)  # lane-major

    grid_spec = pltpu.PrefetchScalarGridSpec(
        num_scalar_prefetch=2,
        grid=(num_pairs,),
        in_specs=[
            pl.BlockSpec((bs, d), lambda p, bi_s, bj_s: (bi_s[p], 0)),  # row block
            pl.BlockSpec((bs, d), lambda p, bi_s, bj_s: (bj_s[p], 0)),  # col block
            pl.BlockSpec((bs, 1), lambda p, bi_s, bj_s: (bi_s[p], 0)),  # row norms
            pl.BlockSpec((8, bs), lambda p, bi_s, bj_s: (bj_s[p], 0)),  # col norms
        ],
        out_specs=pl.BlockSpec((8, 128), lambda p, bi_s, bj_s: (p, 0)),
    )

    cost = pl.CostEstimate(
        flops=num_pairs * (2 * bs * bs * d + 25 * bs * bs),
        transcendentals=num_pairs * 5 * bs * bs,
        bytes_accessed=num_pairs * 4 * (2 * bs * d + bs + 8 * bs + 8 * 128),
    )

    partial_tiles = pl.pallas_call(
        _mmd_pair_kernel,
        out_shape=jax.ShapeDtypeStruct((num_pairs * 8, 128), jnp.float32),
        grid_spec=grid_spec,
        compiler_params=pltpu.CompilerParams(dimension_semantics=("parallel",)),
        cost_estimate=cost,
    )(bi, bj, x, x, sq_row, sq_col)

    # Trailing tiny reduction: weighted per-pair block sums -> penalty.
    partials = partial_tiles.reshape(num_pairs, 8, 128)[:, 0, 0]   # (num_pairs,)
    penalty = jnp.dot(weights, partials) / jnp.float32(bs * bs)
    if nmb > 1:
        penalty = penalty / jnp.float32(nmb * (nmb - 1) / 2.0)
    return penalty * jnp.float32(gamma)


# ---------------- pure-JAX reference (mirrors the PyTorch code) ----------------
def _ref_cdist2(a, b):
    an = jnp.sum(a * a, axis=-1, keepdims=True)
    bn = jnp.sum(b * b, axis=-1, keepdims=True)
    return jnp.maximum(an + bn.T - 2.0 * (a @ b.T), 1e-30)


def _ref_gaussian(a, b):
    d2 = _ref_cdist2(a, b)
    k = jnp.zeros_like(d2)
    for g in GAMMAS:
        k = k + jnp.exp(-g * d2)
    return k


def _ref_mmd(a, b):
    return (_ref_gaussian(a, a).mean()
            + _ref_gaussian(b, b).mean()
            - 2.0 * _ref_gaussian(a, b).mean())


def reference_mmd_loss(x, nmb, gamma):
    n = x.shape[0]
    bs = n // nmb
    penalty = 0.0
    for i in range(nmb):
        for j in range(i + 1, nmb):
            penalty += _ref_mmd(x[i * bs:(i + 1) * bs], x[j * bs:(j + 1) * bs])
    if nmb > 1:
        penalty /= nmb * (nmb - 1) / 2
    return penalty * gamma


if __name__ == "__main__":
    key = jax.random.PRNGKey(0)
    n_domains_batch = 4          # MMDLoss default
    per_domain = 8
    N, D = n_domains_batch * per_domain, 32
    # Quantize features to multiples of 1/4: every product and partial sum in the
    # Gram matrix / squared norms is then exactly representable, so the Pallas MXU
    # and the XLA reference agree exactly on the near-zero self-distances that
    # exp(-1000 * d2) would otherwise amplify from ulp-level accumulation-order
    # differences into percent-level kernel differences.
    x = jnp.round(jax.random.normal(key, (N, D), dtype=jnp.float32) * 4.0) / 4.0

    out = mmd_loss_pallas(x, n_domains_batch=n_domains_batch, gamma=1.0)
    out = jax.block_until_ready(out)

    ref = reference_mmd_loss(x, n_domains_batch, 1.0)
    # Remaining deviation vs the XLA reference is the EUP exp rounding and the
    # <=100x power-ladder amplification on the (small) 0.01 / 0.1 gamma terms.
    assert jnp.allclose(out, ref, rtol=1e-3, atol=1e-4), (out, ref)
    print("KERNEL_OK")
</pallas_src>

<mosaic_0001>
module attributes {stable_mosaic.version = 11 : i64} {
  func.func @_mmd_pair_kernel(%arg0: i32, %arg1: memref<10xi32, #tpu.memory_space<smem>>, %arg2: memref<10xi32, #tpu.memory_space<smem>>, %arg3: memref<8x32xf32, #tpu.memory_space<vmem>>, %arg4: memref<8x32xf32, #tpu.memory_space<vmem>>, %arg5: memref<8x1xf32, #tpu.memory_space<vmem>>, %arg6: memref<8x8xf32, #tpu.memory_space<vmem>>, %arg7: memref<8x128xf32, #tpu.memory_space<vmem>>) attributes {dimension_semantics = [#tpu.dimension_semantics<parallel>], iteration_bounds = array<i64: 10>, scalar_prefetch = 2 : i64, scratch_operands = 0 : i64, tpu.core_type = #tpu.core_type<tc>, window_params = [{transform_indices = @transform_0, window_bounds = array<i64: 8, 32>}, {transform_indices = @transform_1, window_bounds = array<i64: 8, 32>}, {transform_indices = @transform_2, window_bounds = array<i64: 8, 1>}, {transform_indices = @transform_3, window_bounds = array<i64: 8, 8>}, {transform_indices = @transform_4, window_bounds = array<i64: 8, 128>}]} {
    %c0 = arith.constant 0 : index
    %c0_0 = arith.constant 0 : index
    %0 = vector.load %arg3[%c0, %c0_0] : memref<8x32xf32, #tpu.memory_space<vmem>>, vector<8x32xf32>
    %c0_1 = arith.constant 0 : index
    %c0_2 = arith.constant 0 : index
    %1 = vector.load %arg4[%c0_1, %c0_2] : memref<8x32xf32, #tpu.memory_space<vmem>>, vector<8x32xf32>
    %cst = arith.constant dense<0.000000e+00> : vector<8x8xf32>
    %2 = tpu.matmul %0, %1, %cst {dimension_numbers = #tpu.dot_dimension_numbers<[1], [1], [0], [0], [0, 0, 1, 0], [], []>} : vector<8x32xf32>, vector<8x32xf32>, vector<8x8xf32> -> vector<8x8xf32>
    %c0_3 = arith.constant 0 : index
    %c0_4 = arith.constant 0 : index
    %3 = vector.load %arg5[%c0_3, %c0_4] : memref<8x1xf32, #tpu.memory_space<vmem>>, vector<8x1xf32>
    %c0_5 = arith.constant 0 : index
    %c0_6 = arith.constant 0 : index
    %4 = vector.load %arg6[%c0_5, %c0_6] : memref<8x8xf32, #tpu.memory_space<vmem>>, vector<1x8xf32>
    %5 = vector.broadcast %3 : vector<8x1xf32> to vector<8x8xf32>
    %6 = vector.broadcast %4 : vector<1x8xf32> to vector<8x8xf32>
    %7 = arith.addf %5, %6 : vector<8x8xf32>
    %cst_7 = arith.constant 2.000000e+00 : f32
    %8 = vector.broadcast %cst_7 : f32 to vector<8x8xf32>
    %9 = arith.mulf %8, %2 : vector<8x8xf32>
    %10 = arith.subf %7, %9 : vector<8x8xf32>
    %cst_8 = arith.constant 1.000000e-30 : f32
    %11 = vector.broadcast %cst_8 : f32 to vector<8x8xf32>
    %12 = arith.maximumf %10, %11 : vector<8x8xf32>
    %cst_9 = arith.constant -1.000000e-03 : f32
    %13 = vector.broadcast %cst_9 : f32 to vector<8x8xf32>
    %14 = arith.mulf %12, %13 : vector<8x8xf32>
    %15 = math.exp %14 : vector<8x8xf32>
    %16 = arith.mulf %15, %15 : vector<8x8xf32>
    %17 = arith.mulf %16, %16 : vector<8x8xf32>
    %18 = arith.mulf %17, %15 : vector<8x8xf32>
    %19 = arith.mulf %18, %18 : vector<8x8xf32>
    %20 = arith.mulf %19, %19 : vector<8x8xf32>
    %21 = arith.mulf %20, %20 : vector<8x8xf32>
    %22 = arith.mulf %21, %19 : vector<8x8xf32>
    %23 = arith.mulf %22, %22 : vector<8x8xf32>
    %24 = arith.addf %15, %19 : vector<8x8xf32>
    %25 = arith.addf %24, %23 : vector<8x8xf32>
    %cst_10 = arith.constant -1.000000e+00 : f32
    %26 = vector.broadcast %cst_10 : f32 to vector<8x8xf32>
    %27 = arith.mulf %12, %26 : vector<8x8xf32>
    %28 = math.exp %27 : vector<8x8xf32>
    %29 = arith.addf %25, %28 : vector<8x8xf32>
    %cst_11 = arith.constant -1.000000e+01 : f32
    %30 = vector.broadcast %cst_11 : f32 to vector<8x8xf32>
    %31 = arith.mulf %12, %30 : vector<8x8xf32>
    %32 = math.exp %31 : vector<8x8xf32>
    %33 = arith.addf %29, %32 : vector<8x8xf32>
    %cst_12 = arith.constant -1.000000e+02 : f32
    %34 = vector.broadcast %cst_12 : f32 to vector<8x8xf32>
    %35 = arith.mulf %12, %34 : vector<8x8xf32>
    %36 = math.exp %35 : vector<8x8xf32>
    %37 = arith.addf %33, %36 : vector<8x8xf32>
    %cst_13 = arith.constant -1.000000e+03 : f32
    %38 = vector.broadcast %cst_13 : f32 to vector<8x8xf32>
    %39 = arith.mulf %12, %38 : vector<8x8xf32>
    %40 = math.exp %39 : vector<8x8xf32>
    %41 = arith.addf %37, %40 : vector<8x8xf32>
    %cst_14 = arith.constant dense<0.000000e+00> : vector<8xf32>
    %42 = vector.multi_reduction <add>, %41, %cst_14 [1] : vector<8x8xf32> to vector<8xf32>
    %43 = vector.shape_cast %42 : vector<8xf32> to vector<8x1xf32>
    %cst_15 = arith.constant dense<0.000000e+00> : vector<1xf32>
    %44 = vector.multi_reduction <add>, %43, %cst_15 [0] : vector<8x1xf32> to vector<1xf32>
    %45 = vector.shape_cast %44 : vector<1xf32> to vector<1x1xf32>
    %46 = vector.shape_cast %45 : vector<1x1xf32> to vector<1x1xf32>
    %47 = vector.broadcast %46 : vector<1x1xf32> to vector<8x128xf32>
    %c0_16 = arith.constant 0 : index
    %c0_17 = arith.constant 0 : index
    %48 = vector.load %arg7[%c0_16, %c0_17] : memref<8x128xf32, #tpu.memory_space<vmem>>, vector<8x128xf32>
    tpu.vector_store %arg7[%c0_16, %c0_17], %47 {strides = array<i32>} : memref<8x128xf32, #tpu.memory_space<vmem>>, vector<8x128xf32>,
    return
  }
  func.func @transform_0(%arg0: i32, %arg1: memref<10xi32, #tpu.memory_space<smem>>, %arg2: memref<10xi32, #tpu.memory_space<smem>>) -> (i32, i32) {
    %0 = arith.index_cast %arg0 : i32 to index
    %1 = memref.load %arg1[%0] : memref<10xi32, #tpu.memory_space<smem>>
    %c0_i32 = arith.constant 0 : i32
    %c0_i32_0 = arith.constant 0 : i32
    return %1, %c0_i32 : i32, i32
  }
  func.func @transform_1(%arg0: i32, %arg1: memref<10xi32, #tpu.memory_space<smem>>, %arg2: memref<10xi32, #tpu.memory_space<smem>>) -> (i32, i32) {
    %0 = arith.index_cast %arg0 : i32 to index
    %1 = memref.load %arg2[%0] : memref<10xi32, #tpu.memory_space<smem>>
    %c0_i32 = arith.constant 0 : i32
    %c0_i32_0 = arith.constant 0 : i32
    return %1, %c0_i32 : i32, i32
  }
  func.func @transform_2(%arg0: i32, %arg1: memref<10xi32, #tpu.memory_space<smem>>, %arg2: memref<10xi32, #tpu.memory_space<smem>>) -> (i32, i32) {
    %0 = arith.index_cast %arg0 : i32 to index
    %1 = memref.load %arg1[%0] : memref<10xi32, #tpu.memory_space<smem>>
    %c0_i32 = arith.constant 0 : i32
    %c0_i32_0 = arith.constant 0 : i32
    return %1, %c0_i32 : i32, i32
  }
  func.func @transform_3(%arg0: i32, %arg1: memref<10xi32, #tpu.memory_space<smem>>, %arg2: memref<10xi32, #tpu.memory_space<smem>>) -> (i32, i32) {
    %0 = arith.index_cast %arg0 : i32 to index
    %1 = memref.load %arg2[%0] : memref<10xi32, #tpu.memory_space<smem>>
    %c0_i32 = arith.constant 0 : i32
    %c0_i32_0 = arith.constant 0 : i32
    return %1, %c0_i32 : i32, i32
  }
  func.func @transform_4(%arg0: i32, %arg1: memref<10xi32, #tpu.memory_space<smem>>, %arg2: memref<10xi32, #tpu.memory_space<smem>>) -> (i32, i32) {
    %c0_i32 = arith.constant 0 : i32
    %c0_i32_0 = arith.constant 0 : i32
    return %arg0, %c0_i32 : i32, i32
  }
}

</mosaic_0001>

<llo_original>
// kernel: tpu_custom_call.1
$region0: #{tpu_custom_call.1}
  #allocation0 [shape = 'u32[]', space=smem, size = 0x4, offset = 0x4, fixed_abs, tag = 'smem constant byte address 0x4 - core index']
  #allocation1 [shape = 'u32[144,128]{1,0:T(1,128)}', space=vmem, size = 0x12000, scoped, tag = 'internal scratch']
  #allocation2 [shape = 's32[1]{0}', space=sflag, size = 0x4, scoped, tag = 'scoped memory for tpu_custom_call.1']
  #allocation3 [shape = 'u8[512]{0}', space=smem, size = 0x200, scoped, tag = 'prefetched SMEM operand 0']
  #allocation4 [shape = 'u8[512]{0}', space=smem, size = 0x200, scoped, tag = 'prefetched SMEM operand 1']
  %s0 = inlined_call_operand.vmem [shape: s32[10], index: 0, kind: input, shape index: {}]
  %s1 = inlined_call_operand.vmem [shape: s32[10], index: 1, kind: input, shape index: {}]
  %s2 = inlined_call_operand.vmem [shape: f32[32,32], index: 2, kind: input, shape index: {}]
  %s3 = inlined_call_operand.vmem [shape: f32[32,32], index: 3, kind: input, shape index: {}]
  %s4 = inlined_call_operand.vmem [shape: f32[32,1], index: 4, kind: input, shape index: {}]
  %s5 = inlined_call_operand.vmem [shape: f32[32,8], index: 5, kind: input, shape index: {}]
  %s6 = inlined_call_operand.hbm [shape: f32[80,128], index: 6, kind: output, shape index: {}]
  %s7 = sld [smem:[#allocation0]]
  $region49: #{tpu_custom_call.1} parent=0
    _
  %s9 = ssub.s32 1, %s7
  %s10 = scalar_select 0, %s9, %s7
  %s11 = sshll.u32 %s0, 4
  %s12 = int_to_ptr.vmem [resolvable:$true] %s11
  %14 = dma.vmem_to_smem %s12, 16, [#allocation3], [#allocation2]
  %s15 = sshll.u32 %s1, 4
  %s16 = int_to_ptr.vmem [resolvable:$true] %s15
  %18 = dma.vmem_to_smem %s16, 16, [#allocation4], [#allocation2]
  %19 = dma.done [#allocation2], 32
  %20 = sfence
  $region1: #{tpu_custom_call.1} parent=0
    #allocation5 [shape = 'u8[8192]{0}', space=vmem, size = 0x2000, scoped, tag = 'output window, operand 0']
    #allocation6 [shape = 's32[2]{0}', space=sflag, size = 0x8, scoped, tag = 'scoped memory for tpu_custom_call.1']
    %21 = vsyncpa [#allocation6], 0
    %s22 = scalar_lea.sflag [#allocation6], 1
    %23 = vsyncpa %s22, 0
    loop: start=0, step=1, limit=12
    $region2: #{tpu_custom_call.1} parent=1 // loop_pre_header
      _
    $region3: #{tpu_custom_call.1} parent=1 // loop_header
      %s25 = sphi 0, %s29
      %p26 = scmp.ge.s32.totalorder %s25, 12
      %s37 = sphi 0, %s39
      %s40 = sphi 0, %s37
      %s41 = sphi 0, %s40
      %s57 = sphi 0, %s41
      %s65 = sphi 0, %s67
      %s68 = sphi 0, %s65
      %s69 = sphi 0, %s68
      %s85 = sphi 0, %s69
      %s93 = sphi 0, %s95
      %s96 = sphi 0, %s93
      %s97 = sphi 0, %s96
      %s113 = sphi 0, %s97
      %s121 = sphi 0, %s123
      %s124 = sphi 0, %s121
      %s125 = sphi 0, %s124
      %s141 = sphi 0, %s125
      %s147 = sphi 0, %s149
      %s150 = sphi 0, %s147
      %s151 = sphi 0, %s150
      %s167 = sphi 0, %s151
    $region4: #{tpu_custom_call.1} parent=1 // loop_header_branch
      %28 = sbr.rel (%p26) target = $region8
    $region5: #{tpu_custom_call.1} parent=1 // loop_body
      %s30 = ssub.s32 %s25, 1
      %s31 = ssub.s32 %s25, 2
      %s32 = sadd.s32 %s25, 1
      %s33 = sld [smem:[#allocation3 + %s25]]
      %s34 = sld [smem:[#allocation3 + %s32]]
      %s35 = ssub.s32 %s33, %s34
      %p36 = scmp.eq.s32.totalorder %s35, 0
      %s38 = sadd.s32 %s37, 1
      %s39 = scalar_select %p36, %s37, %s38
      %p42 = pneg %p36
      %p43 = scmp.eq.s32.totalorder %s25, 9
      %p44 = por %p42, %p43
      %p45 = scmp.ne.s32.totalorder %s37, %s40
      %p46 = scmp.eq.s32.totalorder %s25, 0
      %p47 = por %p45, %p46
      %p48 = scmp.ne.s32.totalorder %s37, %s40
      %p49 = scmp.eq.s32.totalorder %s30, 9
      %p50 = por %p48, %p49
      %p51 = scmp.ne.s32.totalorder %s40, %s41
      %p52 = scmp.eq.s32.totalorder %s30, 0
      %p53 = por %p51, %p52
      %p54 = scmp.ne.s32.totalorder %s40, %s41
      %p55 = scmp.eq.s32.totalorder %s31, 9
      %p56 = por %p54, %p55
      %p58 = scmp.ne.s32.totalorder %s41, %s57
      %p59 = scmp.eq.s32.totalorder %s31, 0
      %p60 = por %p58, %p59
      %s61 = sld [smem:[#allocation4 + %s25]]
      %s62 = sld [smem:[#allocation4 + %s32]]
      %s63 = ssub.s32 %s61, %s62
      %p64 = scmp.eq.s32.totalorder %s63, 0
      %s66 = sadd.s32 %s65, 1
      %s67 = scalar_select %p64, %s65, %s66
      %p70 = pneg %p64
      %p71 = scmp.eq.s32.totalorder %s25, 9
      %p72 = por %p70, %p71
      %p73 = scmp.ne.s32.totalorder %s65, %s68
      %p74 = scmp.eq.s32.totalorder %s25, 0
      %p75 = por %p73, %p74
      %p76 = scmp.ne.s32.totalorder %s65, %s68
      %p77 = scmp.eq.s32.totalorder %s30, 9
      %p78 = por %p76, %p77
      %p79 = scmp.ne.s32.totalorder %s68, %s69
      %p80 = scmp.eq.s32.totalorder %s30, 0
      %p81 = por %p79, %p80
      %p82 = scmp.ne.s32.totalorder %s68, %s69
      %p83 = scmp.eq.s32.totalorder %s31, 9
      %p84 = por %p82, %p83
      %p86 = scmp.ne.s32.totalorder %s69, %s85
      %p87 = scmp.eq.s32.totalorder %s31, 0
      %p88 = por %p86, %p87
      %s89 = sld [smem:[#allocation3 + %s25]]
      %s90 = sld [smem:[#allocation3 + %s32]]
      %s91 = ssub.s32 %s89, %s90
      %p92 = scmp.eq.s32.totalorder %s91, 0
      %s94 = sadd.s32 %s93, 1
      %s95 = scalar_select %p92, %s93, %s94
      %p98 = pneg %p92
      %p99 = scmp.eq.s32.totalorder %s25, 9
      %p100 = por %p98, %p99
      %p101 = scmp.ne.s32.totalorder %s93, %s96
      %p102 = scmp.eq.s32.totalorder %s25, 0
      %p103 = por %p101, %p102
      %p104 = scmp.ne.s32.totalorder %s93, %s96
      %p105 = scmp.eq.s32.totalorder %s30, 9
      %p106 = por %p104, %p105
      %p107 = scmp.ne.s32.totalorder %s96, %s97
      %p108 = scmp.eq.s32.totalorder %s30, 0
      %p109 = por %p107, %p108
      %p110 = scmp.ne.s32.totalorder %s96, %s97
      %p111 = scmp.eq.s32.totalorder %s31, 9
      %p112 = por %p110, %p111
      %p114 = scmp.ne.s32.totalorder %s97, %s113
      %p115 = scmp.eq.s32.totalorder %s31, 0
      %p116 = por %p114, %p115
      %s117 = sld [smem:[#allocation4 + %s25]]
      %s118 = sld [smem:[#allocation4 + %s32]]
      %s119 = ssub.s32 %s117, %s118
      %p120 = scmp.eq.s32.totalorder %s119, 0
      %s122 = sadd.s32 %s121, 1
      %s123 = scalar_select %p120, %s121, %s122
      %p126 = pneg %p120
      %p127 = scmp.eq.s32.totalorder %s25, 9
      %p128 = por %p126, %p127
      %p129 = scmp.ne.s32.totalorder %s121, %s124
      %p130 = scmp.eq.s32.totalorder %s25, 0
      %p131 = por %p129, %p130
      %p132 = scmp.ne.s32.totalorder %s121, %s124
      %p133 = scmp.eq.s32.totalorder %s30, 9
      %p134 = por %p132, %p133
      %p135 = scmp.ne.s32.totalorder %s124, %s125
      %p136 = scmp.eq.s32.totalorder %s30, 0
      %p137 = por %p135, %p136
      %p138 = scmp.ne.s32.totalorder %s124, %s125
      %p139 = scmp.eq.s32.totalorder %s31, 9
      %p140 = por %p138, %p139
      %p142 = scmp.ne.s32.totalorder %s125, %s141
      %p143 = scmp.eq.s32.totalorder %s31, 0
      %p144 = por %p142, %p143
      %s145 = ssub.s32 %s25, %s32
      %p146 = scmp.eq.s32.totalorder %s145, 0
      %s148 = sadd.s32 %s147, 1
      %s149 = scalar_select %p146, %s147, %s148
      %p152 = pneg %p146
      %p153 = scmp.eq.s32.totalorder %s25, 9
      %p154 = por %p152, %p153
      %p155 = scmp.ne.s32.totalorder %s147, %s150
      %p156 = scmp.eq.s32.totalorder %s25, 0
      %p157 = por %p155, %p156
      %p158 = scmp.ne.s32.totalorder %s147, %s150
      %p159 = scmp.eq.s32.totalorder %s30, 9
      %p160 = por %p158, %p159
      %p161 = scmp.ne.s32.totalorder %s150, %s151
      %p162 = scmp.eq.s32.totalorder %s30, 0
      %p163 = por %p161, %p162
      %p164 = scmp.ne.s32.totalorder %s150, %s151
      %p165 = scmp.eq.s32.totalorder %s31, 9
      %p166 = por %p164, %p165
      %p168 = scmp.ne.s32.totalorder %s151, %s167
      %p169 = scmp.eq.s32.totalorder %s31, 0
      %p170 = por %p168, %p169
      %p171 = scmp.le.s32.totalorder 1, %s25
      %p172 = scmp.lt.s32.totalorder %s25, 11
      %p173 = pnand %p171, %p172
      %p174 = pneg %p173
      // Predicated region
      $region9: #{tpu_custom_call.1} parent=5 // pred_check
        _
      $region10: #{tpu_custom_call.1} parent=5 // pred_check_branch
        %176 = sbr.rel (%p173) target = $region12
      $region11: #{tpu_custom_call.1} parent=5 // pred_region
        %s177 = ssub.s32 %s25, 1
      $region12: #{tpu_custom_call.1} parent=5 // pred_fallthru
        _
      %p178 = scmp.lt.s32.totalorder %s25, 10
      // Predicated region
      $region13: #{tpu_custom_call.1} parent=5 // pred_check
        %p179 = pneg %p178
      $region14: #{tpu_custom_call.1} parent=5 // pred_check_branch
        %181 = sbr.rel (%p179) target = $region16
      $region15: #{tpu_custom_call.1} parent=5 // pred_region
        // Predicated region
        $region17: #{tpu_custom_call.1} parent=15 // pred_check
          %p182 = pneg %p47
        $region18: #{tpu_custom_call.1} parent=15 // pred_check_branch
          %184 = sbr.rel (%p182) target = $region20
        $region19: #{tpu_custom_call.1} parent=15 // pred_region
          %s185 = sld [smem:[#allocation3 + %s25]]
          %p186 = scmp.lt.s32.totalorder %s185, 3
          %s187 = scalar_select %p186, %s185, 3
          %s188 = smul.addr %s187, 8
          %s189 = scalar_lea.vmem %s2, %s188
          %s190 = sld [smem:[#allocation3 + %s25]]
        $region20: #{tpu_custom_call.1} parent=15 // pred_fallthru
          _
        // Predicated region
        $region21: #{tpu_custom_call.1} parent=15 // pred_check
          %p191 = pneg %p75
        $region22: #{tpu_custom_call.1} parent=15 // pred_check_branch
          %193 = sbr.rel (%p191) target = $region24
        $region23: #{tpu_custom_call.1} parent=15 // pred_region
          %s194 = sld [smem:[#allocation4 + %s25]]
          %p195 = scmp.lt.s32.totalorder %s194, 3
          %s196 = scalar_select %p195, %s194, 3
          %s197 = smul.addr %s196, 8
          %s198 = scalar_lea.vmem %s3, %s197
          %s199 = sld [smem:[#allocation4 + %s25]]
        $region24: #{tpu_custom_call.1} parent=15 // pred_fallthru
          _
        // Predicated region
        $region25: #{tpu_custom_call.1} parent=15 // pred_check
          %p200 = pneg %p103
        $region26: #{tpu_custom_call.1} parent=15 // pred_check_branch
          %202 = sbr.rel (%p200) target = $region28
        $region27: #{tpu_custom_call.1} parent=15 // pred_region
          %s203 = sld [smem:[#allocation3 + %s25]]
          %p204 = scmp.lt.s32.totalorder %s203, 3
          %s205 = scalar_select %p204, %s203, 3
          %s206 = smul.addr %s205, 8
          %s207 = scalar_lea.vmem %s4, %s206
          %s208 = sld [smem:[#allocation3 + %s25]]
        $region28: #{tpu_custom_call.1} parent=15 // pred_fallthru
          _
        // Predicated region
        $region29: #{tpu_custom_call.1} parent=15 // pred_check
          %p209 = pneg %p131
        $region30: #{tpu_custom_call.1} parent=15 // pred_check_branch
          %211 = sbr.rel (%p209) target = $region32
        $region31: #{tpu_custom_call.1} parent=15 // pred_region
          %s212 = sld [smem:[#allocation4 + %s25]]
          %p213 = scmp.lt.s32.totalorder %s212, 3
          %s214 = scalar_select %p213, %s212, 3
          %s215 = smul.addr %s214, 8
          %s216 = scalar_lea.vmem %s5, %s215
          %s217 = sld [smem:[#allocation4 + %s25]]
        $region32: #{tpu_custom_call.1} parent=15 // pred_fallthru
          _
      $region16: #{tpu_custom_call.1} parent=5 // pred_fallthru
        _
      %p218 = scmp.le.s32.totalorder 1, %s25
      %p219 = scmp.lt.s32.totalorder %s25, 11
      %p220 = pnand %p218, %p219
      %p221 = pneg %p220
      // Predicated region
      $region33: #{tpu_custom_call.1} parent=5 // pred_check
        _
      $region34: #{tpu_custom_call.1} parent=5 // pred_check_branch
        %223 = sbr.rel (%p220) target = $region36
      $region35: #{tpu_custom_call.1} parent=5 // pred_region
        %s224 = ssub.s32 %s25, 1
        %s225 = sld [smem:[#allocation3 + %s30]]
        %p226 = scmp.lt.s32.totalorder %s225, 3
        %s227 = scalar_select %p226, %s225, 3
        %s228 = smul.addr %s227, 8
        %s229 = scalar_lea.vmem %s2, %s228
        %p230 = pneg %p53
        %p231 = pneg %p50
        %s232 = sld [smem:[#allocation4 + %s30]]
        %p233 = scmp.lt.s32.totalorder %s232, 3
        %s234 = scalar_select %p233, %s232, 3
        %s235 = smul.addr %s234, 8
        %s236 = scalar_lea.vmem %s3, %s235
        %p237 = pneg %p81
        %p238 = pneg %p78
        %s239 = sld [smem:[#allocation3 + %s30]]
        %p240 = scmp.lt.s32.totalorder %s239, 3
        %s241 = scalar_select %p240, %s239, 3
        %s242 = smul.addr %s241, 8
        %s243 = scalar_lea.vmem %s4, %s242
        %p244 = pneg %p109
        %p245 = pneg %p106
        %s246 = sld [smem:[#allocation4 + %s30]]
        %p247 = scmp.lt.s32.totalorder %s246, 3
        %s248 = scalar_select %p247, %s246, 3
        %s249 = smul.addr %s248, 8
        %s250 = scalar_lea.vmem %s5, %s249
        %p251 = pneg %p137
        %p252 = pneg %p134
        %p253 = pneg %p163
        %p254 = pneg %p160
        %s255 = sand.u32 %s150, 1
        %s256 = scalar_lea.sflag [#allocation6], %s255
        %s257 = sand.u32 %s150, 1
        %s258 = smul.addr %s257, 8
        %s259 = scalar_lea.vmem [#allocation5], %s258
        %s260 = sld [smem:[#allocation3 + %s30]]
        %p261 = scmp.lt.s32.totalorder %s260, 3
        %s262 = scalar_select %p261, %s260, 3
        %s263 = smul.addr %s262, 8
        %s264 = scalar_lea.vmem %s2, %s263
        %s265 = sld [smem:[#allocation3 + %s30]]
        %s266 = sld [smem:[#allocation4 + %s30]]
        %p267 = scmp.lt.s32.totalorder %s266, 3
        %s268 = scalar_select %p267, %s266, 3
        %s269 = smul.addr %s268, 8
        %s270 = scalar_lea.vmem %s3, %s269
        %s271 = sld [smem:[#allocation4 + %s30]]
        %s272 = sld [smem:[#allocation3 + %s30]]
        %p273 = scmp.lt.s32.totalorder %s272, 3
        %s274 = scalar_select %p273, %s272, 3
        %s275 = smul.addr %s274, 8
        %s276 = scalar_lea.vmem %s4, %s275
        %s277 = sld [smem:[#allocation3 + %s30]]
        %s278 = sld [smem:[#allocation4 + %s30]]
        %p279 = scmp.lt.s32.totalorder %s278, 3
        %s280 = scalar_select %p279, %s278, 3
        %s281 = smul.addr %s280, 8
        %s282 = scalar_lea.vmem %s5, %s281
        %s283 = sld [smem:[#allocation4 + %s30]]
        %v284 = vld [vmem:[%s264] sm:$0xff]
        %v285 = vld [vmem:[%s270] sm:$0xff]
        %vm286 = vcmask 261120
        %v288 = vsel %vm286, %v284, 0
        %v291 = vsel %vm286, %v285, 0
        %293 = vmatprep.subr.mxu0 0.0
        %294 = vmatpush1.xpose.msra.mxu0 %v291
        %295 = vmatprep.subr.mxu0 0.0
        %296 = vmatpush1.xpose.msra.mxu0 0.0
        %297 = vmatprep.subr.mxu0 0.0
        %298 = vmatpush1.xpose.msra.mxu0 0.0
        %299 = vmatprep.subr.mxu0 0.0
        %300 = vmatpush1.xpose.msra.mxu0 0.0
        %301 = vmatprep.subr.mxu0 0.0
        %302 = vmatpush1.xpose.msra.mxu0 0.0
        %303 = vmatprep.subr.mxu0 0.0
        %304 = vmatpush1.xpose.msra.mxu0 0.0
        %305 = vmatprep.subr.mxu0 0.0
        %306 = vmatpush1.xpose.msra.mxu0 0.0
        %307 = vmatprep.subr.mxu0 0.0
        %308 = vmatpush1.xpose.msra.mxu0 0.0
        %309 = vmatprep.subr.mxu0 0.0
        %310 = vmatpush1.xpose.msra.mxu0 0.0
        %311 = vmatprep.subr.mxu0 0.0
        %312 = vmatpush1.xpose.msra.mxu0 0.0
        %313 = vmatprep.subr.mxu0 0.0
        %314 = vmatpush1.xpose.msra.mxu0 0.0
        %315 = vmatprep.subr.mxu0 0.0
        %316 = vmatpush1.xpose.msra.mxu0 0.0
        %317 = vmatprep.subr.mxu0 0.0
        %318 = vmatpush1.xpose.msra.mxu0 0.0
        %319 = vmatprep.subr.mxu0 0.0
        %320 = vmatpush1.xpose.msra.mxu0 0.0
        %321 = vmatprep.subr.mxu0 0.0
        %322 = vmatpush1.xpose.msra.mxu0 0.0
        %323 = vmatprep.subr.mxu0 0.0
        %324 = vmatpush1.xpose.msra.mxu0 0.0
        %325 = vmatprep.subr.mxu0 0.0
        %326 = vmatpush1.xpose.msra.mxu0 0.0
        %327 = vmatprep.subr.mxu0 0.0
        %328 = vmatpush1.xpose.msra.mxu0 0.0
        %329 = vmatprep.subr.mxu0 0.0
        %330 = vmatpush1.xpose.msra.mxu0 0.0
        %331 = vmatprep.subr.mxu0 0.0
        %332 = vmatpush1.xpose.msra.mxu0 0.0
        %333 = vmatprep.subr.mxu0 0.0
        %334 = vmatpush1.xpose.msra.mxu0 0.0
        %335 = vmatprep.subr.mxu0 0.0
        %336 = vmatpush1.xpose.msra.mxu0 0.0
        %337 = vmatprep.subr.mxu0 0.0
        %338 = vmatpush1.xpose.msra.mxu0 0.0
        %339 = vmatprep.subr.mxu0 0.0
        %340 = vmatpush1.xpose.msra.mxu0 0.0
        %341 = vmatprep.subr.mxu0 0.0
        %342 = vmatpush1.xpose.msra.mxu0 0.0
        %343 = vmatprep.subr.mxu0 0.0
        %344 = vmatpush1.xpose.msra.mxu0 0.0
        %345 = vmatprep.subr.mxu0 0.0
        %346 = vmatpush1.xpose.msra.mxu0 0.0
        %347 = vmatprep.subr.mxu0 0.0
        %348 = vmatpush1.xpose.msra.mxu0 0.0
        %349 = vmatprep.subr.mxu0 0.0
        %350 = vmatpush1.xpose.msra.mxu0 0.0
        %351 = vmatprep.subr.mxu0 0.0
        %352 = vmatpush1.xpose.msra.mxu0 0.0
        %353 = vmatprep.subr.mxu0 0.0
        %354 = vmatpush1.xpose.msra.mxu0 0.0
        %355 = vmatprep.subr.mxu0 0.0
        %356 = vmatpush1.xpose.msra.mxu0 0.0
        %357 = vmatprep.mubr.f32.mxu0 0.0
        %358 = vmatmul.mubr.f32.gmra.mrb[0].mxu0 %v288
        %v359 = vpop.f32.mrb[0].mxu0
        %v360 = vadd.f32 0.0, %v359
        %v361 = vpop.f32.mrb[0].mxu0
        %362 = vdwg.mxu0
        %v363 = vld [vmem:[%s276] sm:$0xff]
        %v364 = vld [vmem:[%s282] sm:$0x1]
        %366 = vset.pattern.permute.xlu0 0
        %367 = vperm.xlu0 %366, %v363
        %v368 = vpop.permute.xlu0 %367
        %v370 = vlaneseq
        %v371 = vshrl.u32 %v370, 7
        %v372 = vsub.s32 0, %v371
        %v373 = vrot.slane %v364, %v372
        %v374 = vadd.f32 %v368, %v373
        %v375 = vmul.f32 %v360, 2.0
        %v376 = vsub.f32 %v374, %v375
        %v377 = vmax.f32 %v376, 1e-30
        %v378 = vmul.f32 %v377, -0.001
        %v379 = vmul.f32 %v378, 1.442695
        %v380 = vpow.pop %v379
        %v381 = vmul.f32 %v380, %v380
        %v382 = vmul.f32 %v381, %v381
        %v383 = vmul.f32 %v382, %v380
        %v384 = vmul.f32 %v383, %v383
        %v385 = vmul.f32 %v384, %v384
        %v386 = vmul.f32 %v385, %v385
        %v387 = vmul.f32 %v386, %v384
        %v388 = vmul.f32 %v387, %v387
        %v389 = vadd.f32 %v380, %v384
        %v390 = vadd.f32 %v389, %v388
        %v391 = vmul.f32 %v377, -1.0
        %v392 = vmul.f32 %v391, 1.442695
        %v393 = vpow.pop %v392
        %v394 = vadd.f32 %v390, %v393
        %v395 = vmul.f32 %v377, -10.0
        %v396 = vmul.f32 %v395, 1.442695
        %v397 = vpow.pop %v396
        %v398 = vadd.f32 %v394, %v397
        %v399 = vmul.f32 %v377, -100.0
        %v400 = vmul.f32 %v399, 1.442695
        %v401 = vpow.pop %v400
        %v402 = vadd.f32 %v398, %v401
        %v403 = vmul.f32 %v377, -1000.0
        %v404 = vmul.f32 %v403, 1.442695
        %v405 = vpow.pop %v404
        %v406 = vadd.f32 %v402, %v405
        %vm407 = vcmask 64512
        %v408 = vsel %vm407, %v406, 0.0
        %409 = vadd.xlane.f32.xlu0 %v408
        %v410 = vpop.xlane.xlu0 %409
        %v411 = vrot.slane %v410, 4
        %v412 = vadd.f32 %v410, %v411
        %v413 = vrot.slane %v412, 2
        %v414 = vadd.f32 %v412, %v413
        %v415 = vrot.slane %v414, 1
        %v416 = vadd.f32 %v414, %v415
        %417 = vst [vmem:[%s259] sm:$0xff] %v416
        %s418 = sand.u32 %s150, 1
        %s419 = scalar_lea.sflag [#allocation6], %s418
        %s420 = sand.u32 %s150, 1
        %s421 = smul.addr %s420, 8
        %s422 = scalar_lea.vmem [#allocation5], %s421
        // Predicated region
        $region37: #{tpu_custom_call.1} parent=35 // pred_check
          %p423 = pneg %p160
        $region38: #{tpu_custom_call.1} parent=35 // pred_check_branch
          %425 = sbr.rel (%p423) target = $region40
        $region39: #{tpu_custom_call.1} parent=35 // pred_region
          %s427 = ssub.s32 128, 128
          %428 = vsyncadd %s419, %s427
          %s429 = smul.addr %s30, 128
          %s430 = scalar_lea.hbm %s6, %s429
          %s432 = sshll.u32 %s422, 4
          %s433 = int_to_ptr.vmem [resolvable:$true] %s432
          %435 = dma.vmem_to_hbm [thread:$0]  %s433, 128, %s430, %s419
        $region40: #{tpu_custom_call.1} parent=35 // pred_fallthru
          _
      $region36: #{tpu_custom_call.1} parent=5 // pred_fallthru
        _
      %p436 = scmp.le.s32.totalorder 2, %s25
      // Predicated region
      $region41: #{tpu_custom_call.1} parent=5 // pred_check
        %p437 = pneg %p436
      $region42: #{tpu_custom_call.1} parent=5 // pred_check_branch
        %439 = sbr.rel (%p437) target = $region44
      $region43: #{tpu_custom_call.1} parent=5 // pred_region
        %s440 = ssub.s32 %s25, 2
        // Predicated region
        $region45: #{tpu_custom_call.1} parent=43 // pred_check
          %p441 = pneg %p166
        $region46: #{tpu_custom_call.1} parent=43 // pred_check_branch
          %443 = sbr.rel (%p441) target = $region48
        $region47: #{tpu_custom_call.1} parent=43 // pred_region
          %s444 = sand.u32 %s151, 1
          %s445 = scalar_lea.sflag [#allocation6], %s444
          %s446 = sand.u32 %s151, 1
          %s447 = smul.addr %s446, 8
          %s448 = scalar_lea.vmem [#allocation5], %s447
          %449 = dma.done %s445, 128
        $region48: #{tpu_custom_call.1} parent=43 // pred_fallthru
          _
      $region44: #{tpu_custom_call.1} parent=5 // pred_fallthru
        _
    $region6: #{tpu_custom_call.1} parent=1 // loop_footer
      %s29 = sadd.s32 1, %s25
    $region7: #{tpu_custom_call.1} parent=1 // loop_footer_branch
      %24 = sbr.rel target = $region3
    $region8: #{tpu_custom_call.1} parent=1 // loop_exit
      _
    %450 = vsyncpa [#allocation6], 1
    %s451 = scalar_lea.sflag [#allocation6], 1
    %452 = vsyncpa %s451, 1

</llo_original>
